<compile_context>
chip_gen: v7x
topology: tpu7x:2x2x1
jax: 0.10.0
libtpu: 0.0.40
codegen_flags: <defaults>
</compile_context>

<pallas_src>
import functools

import jax
import jax.numpy as jnp
import numpy as np
from jax import lax
from jax.experimental import pallas as pl
from jax.experimental.pallas import tpu as pltpu

DEPTH = 3  # the module hard-codes cell1/cell2/cell3


def _round_up(a, m):
    return (a + m - 1) // m * m


def stacked_rnn_kernel(block_max_ref,   # SMEM scalar prefetch: (n_blocks,) int32
                       x_ref,           # (t_tile, b_block, H)   time-major input tile
                       lens_ref,        # (b_block, 1) int32     per-row seq lens
                       wih_ref,         # (DEPTH, H, H)          W_ih.T per layer
                       whh_ref,         # (DEPTH, H, H)          W_hh.T per layer
                       b_ref,           # (DEPTH, H)             b_ih + b_hh
                       out_ref,         # (t_tile, b_block, DEPTH*H)  output tile
                       h_scratch,       # VMEM (DEPTH, b_block, H)  carried hidden state
                       x0_scratch,      # VMEM (t_tile, b_block, H) hoisted layer-0 proj
                       *, depth, hidden, b_block, t_tile, matmul_dtype,
                       lane_dense):
    i = pl.program_id(0)                          # batch block (parallel)
    t = pl.program_id(1)                          # time tile   (arbitrary / sequential)
    t_start = t * t_tile
    block_max = block_max_ref[i]                  # max seq len in this batch block
    steps = jnp.clip(block_max - t_start, 0, t_tile)   # valid steps in this tile

    # Fresh hidden state at the first time tile of every batch block.
    @pl.when(t == 0)
    def _():
        h_scratch[...] = jnp.zeros_like(h_scratch)

    # Zero-fill only tiles that contain steps past block_max (ragged tail or
    # fully-past tiles). Fully-valid tiles are written densely by the loop.
    @pl.when(steps < t_tile)
    def _():
        out_ref[...] = jnp.zeros_like(out_ref)

    @pl.when(steps > 0)
    def _():
        lens = lens_ref[...]                                     # (b_block, 1)
        bias = b_ref[...]                                        # (depth, H)
        # Pre-broadcast biases once per tile (JAX does not CSE broadcast_in_dim).
        bs = [jnp.broadcast_to(bias[k:k + 1, :], (b_block, hidden))
              for k in range(depth)]
        wih = [wih_ref[k] for k in range(depth)]                 # (H, H) each
        whh = [whh_ref[k] for k in range(depth)]
        mdt = matmul_dtype

        # Hoist layer 0's input projection out of the recurrence: one big
        # (t_tile*b_block, H) @ (H, H) matmul per tile, stored to VMEM scratch.
        x_all = x_ref[...].reshape(t_tile * b_block, hidden)
        if mdt is not None:
            x_all = x_all.astype(mdt)
        x0 = jnp.dot(x_all, wih[0], preferred_element_type=jnp.float32)
        x0_scratch[...] = x0.reshape(t_tile, b_block, hidden) + bs[0]

        # Hidden state rides the loop carry (vregs) inside the tile.
        h0 = tuple(h_scratch[k] for k in range(depth))

        def step(jj, hs):
            valid = (t_start + jj) < lens                        # (b_block, 1)
            new_hs = []
            inp = None
            for k in range(depth):
                h_prev = hs[k]
                h_op = h_prev.astype(mdt) if mdt is not None else h_prev
                rec = jnp.dot(h_op, whh[k], preferred_element_type=jnp.float32)
                if k == 0:
                    pre = x0_scratch[jj] + rec                   # bias folded in
                else:
                    x_op = inp.astype(mdt) if mdt is not None else inp
                    pre = (jnp.dot(x_op, wih[k],
                                   preferred_element_type=jnp.float32)
                           + rec + bs[k])
                h_new = jnp.tanh(pre)
                # Freeze hidden state past each row's own seq_len (robustness:
                # padded garbage can never propagate).
                h_new = jnp.where(valid, h_new, h_prev)
                new_hs.append(h_new)
                inp = h_new
            if lane_dense:
                # DEPTH*H % 128 == 0: one unmasked lane-dense store per step.
                stacked = jnp.concatenate(new_hs, axis=-1)
                out_ref[jj] = jnp.where(valid, stacked, 0.0).astype(out_ref.dtype)
            else:
                # Small H: store each layer into its own lane slice — no
                # per-step lane concatenates on the serial path.
                for k in range(depth):
                    out_ref[jj, :, pl.ds(k * hidden, hidden)] = (
                        jnp.where(valid, new_hs[k], 0.0).astype(out_ref.dtype))
            return tuple(new_hs)

        hs_final = lax.fori_loop(0, steps, step, h0)
        for k in range(depth):
            h_scratch[k] = hs_final[k]


def stacked_rnn(x, seq_lens, w_ih, w_hh, b_ih, b_hh, *,
                b_block=None, t_tile=None, matmul_dtype=None,
                sort_by_length=True, vmem_budget_bytes=None):
    """x: (B, T, H) f32; seq_lens: (B,) int; weights in PyTorch (out, in) layout."""
    B, T, H = x.shape
    depth = w_ih.shape[0]
    assert depth == DEPTH, "module hard-codes three cells"

    seq_lens = seq_lens.astype(jnp.int32)

    # Generation-aware VMEM sizing (v5e/v6e: 128 MiB, v7x: 64 MiB).
    try:
        vmem_cap = int(pltpu.get_tpu_info().vmem_capacity_bytes)
    except Exception:
        vmem_cap = 64 << 20
    if vmem_budget_bytes is None:
        vmem_budget_bytes = min(24 << 20, vmem_cap // 3)

    # Sort sequences by length (descending) so each batch block's max length is
    # close to its mean (fewer serial timesteps); un-permute at the end.
    if sort_by_length:
        order = jnp.argsort(-seq_lens)
        inv_order = jnp.argsort(order)
        x = x[order]
        seq_lens = seq_lens[order]

    # Batch blocking: sublane multiple of 8; >= 2 blocks when B > 8 so the
    # "parallel" grid axis shards across v7x's two TensorCores.
    if b_block is None:
        if B <= 8:
            b_block = 8
        else:
            b_block = min(128, _round_up(pl.cdiv(B, 2), 8))
    n_blocks = pl.cdiv(B, b_block)
    B_pad = n_blocks * b_block

    # Time tiling: bound the double-buffered x/out VMEM residency.
    DW = depth * H
    if t_tile is None:
        per_step_bytes = 2 * b_block * (H + DW) * 4   # double-buffered x + out
        t_tile = int(max(1, min(T, vmem_budget_bytes // per_step_bytes)))
    n_t = pl.cdiv(T, t_tile)
    T_pad = n_t * t_tile

    if B_pad != B or T_pad != T:
        x = jnp.pad(x, ((0, B_pad - B), (0, T_pad - T), (0, 0)))
    if B_pad != B:
        seq_lens = jnp.pad(seq_lens, (0, B_pad - B))

    # Weights: (out, in) -> (in, out) so the kernel right-multiplies.  Optional
    # bf16 cast happens host-side (halves weight DMA, feeds MXU at bf16 rate).
    w_ih_t = jnp.swapaxes(w_ih, 1, 2)
    w_hh_t = jnp.swapaxes(w_hh, 1, 2)
    if matmul_dtype is not None:
        w_ih_t = w_ih_t.astype(matmul_dtype)
        w_hh_t = w_hh_t.astype(matmul_dtype)
    bias = (b_ih + b_hh).astype(jnp.float32)             # (depth, H)

    x_t = jnp.transpose(x, (1, 0, 2))                    # (T_pad, B_pad, H)
    lens2d = seq_lens.reshape(B_pad, 1)
    block_max = seq_lens.reshape(n_blocks, b_block).max(axis=1)   # (n_blocks,)

    # Lane-dense single store when DEPTH*H is a multiple of 128; otherwise
    # per-layer slice stores (no per-step concats for small H).
    lane_dense = (DW % 128 == 0)

    kernel = functools.partial(
        stacked_rnn_kernel, depth=depth, hidden=H, b_block=b_block,
        t_tile=t_tile, matmul_dtype=matmul_dtype, lane_dense=lane_dense)

    wbytes = jnp.dtype(matmul_dtype).itemsize if matmul_dtype is not None else 4
    vmem_need = (2 * t_tile * b_block * (H + DW) * 4               # x+out, dbl-buffered
                 + 2 * (2 * depth * H * H * wbytes + depth * H * 4)  # weights + bias
                 + (depth + t_tile) * b_block * H * 4              # scratch
                 + (2 << 20))
    vmem_limit = int(min(max(vmem_need, 32 << 20), int(vmem_cap * 0.875)))

    out_t = pl.pallas_call(
        kernel,
        out_shape=jax.ShapeDtypeStruct((T_pad, B_pad, DW), x.dtype),
        grid_spec=pltpu.PrefetchScalarGridSpec(
            num_scalar_prefetch=1,
            grid=(n_blocks, n_t),
            in_specs=[
                pl.BlockSpec((t_tile, b_block, H), lambda i, t, bm: (t, i, 0)),   # x
                pl.BlockSpec((b_block, 1), lambda i, t, bm: (i, 0)),              # lens
                pl.BlockSpec((depth, H, H), lambda i, t, bm: (0, 0, 0)),          # W_ih.T
                pl.BlockSpec((depth, H, H), lambda i, t, bm: (0, 0, 0)),          # W_hh.T
                pl.BlockSpec((depth, H), lambda i, t, bm: (0, 0)),                # bias
            ],
            out_specs=pl.BlockSpec((t_tile, b_block, DW),
                                   lambda i, t, bm: (t, i, 0)),
            scratch_shapes=[
                pltpu.VMEM((depth, b_block, H), jnp.float32),   # hidden state
                pltpu.VMEM((t_tile, b_block, H), jnp.float32),  # layer-0 projection
            ],
        ),
        compiler_params=pltpu.CompilerParams(
            dimension_semantics=("parallel", "arbitrary"),
            vmem_limit_bytes=vmem_limit),
    )(block_max, x_t, lens2d, w_ih_t, w_hh_t, bias)

    out = jnp.transpose(out_t, (1, 0, 2))[:B, :T]        # (B, T, DEPTH*H)
    if sort_by_length:
        out = out[inv_order]
    return out.reshape(B, T, depth, H)


def ref_forward(x, seq_lens, w_ih, w_hh, b_ih, b_hh):
    """Pure-numpy transcription of StackedLSTM.forward (RNNCell-tanh cells)."""
    x = np.asarray(x); w_ih = np.asarray(w_ih); w_hh = np.asarray(w_hh)
    b_ih = np.asarray(b_ih); b_hh = np.asarray(b_hh)
    B, T, H = x.shape
    out = np.zeros((B, T, DEPTH, H), np.float32)
    init_state = np.zeros((H,), np.float32)
    for i in range(B):
        for j in range(int(seq_lens[i])):
            for k in range(DEPTH):
                h_prev = init_state if j == 0 else out[i, j - 1, k]
                xk = x[i, j] if k == 0 else out[i, j, k - 1]
                out[i, j, k] = np.tanh(xk @ w_ih[k].T + b_ih[k]
                                       + h_prev @ w_hh[k].T + b_hh[k])
    return out


if __name__ == "__main__":
    B, T, H = 12, 12, 32
    key = jax.random.PRNGKey(0)
    kx, kwi, kwh, kbi, kbh = jax.random.split(key, 5)

    x = jax.random.normal(kx, (B, T, H), dtype=jnp.float32)
    w_ih = 0.1 * jax.random.normal(kwi, (DEPTH, H, H), dtype=jnp.float32)
    w_hh = 0.1 * jax.random.normal(kwh, (DEPTH, H, H), dtype=jnp.float32)
    b_ih = 0.1 * jax.random.normal(kbi, (DEPTH, H), dtype=jnp.float32)
    b_hh = 0.1 * jax.random.normal(kbh, (DEPTH, H), dtype=jnp.float32)
    # Ragged lengths: exercises length-sorting, two batch blocks, and
    # fully-valid / boundary / fully-past time tiles.
    seq_lens = jnp.array([12, 9, 7, 5, 3, 1, 11, 10, 8, 6, 4, 2],
                         dtype=jnp.int32)

    # t_tile=4 forces multiple time tiles even at this toy T so the tiled /
    # carried-hidden-state path is exercised; at real sizes leave t_tile=None.
    out = stacked_rnn(x, seq_lens, w_ih, w_hh, b_ih, b_hh, t_tile=4)
    out = jax.block_until_ready(out)

    ref = ref_forward(x, seq_lens, w_ih, w_hh, b_ih, b_hh)
    np.testing.assert_allclose(np.asarray(out), ref, rtol=1e-5, atol=1e-5)

    # TODO(synk): when matmul_dtype=jnp.bfloat16 is enabled, compare against a
    # bf16-tolerant reference (the 1e-5 assert above is for the f32 path).
    print("KERNEL_OK")
</pallas_src>

<mosaic_0001>
module attributes {stable_mosaic.version = 11 : i64} {
  func.func @stacked_rnn_kernel(%arg0: i32, %arg1: i32, %arg2: memref<2xi32, #tpu.memory_space<smem>>, %arg3: memref<4x8x32xf32, #tpu.memory_space<vmem>>, %arg4: memref<8x1xi32, #tpu.memory_space<vmem>>, %arg5: memref<3x32x32xf32, #tpu.memory_space<vmem>>, %arg6: memref<3x32x32xf32, #tpu.memory_space<vmem>>, %arg7: memref<3x32xf32, #tpu.memory_space<vmem>>, %arg8: memref<4x8x96xf32, #tpu.memory_space<vmem>>, %arg9: memref<3x8x32xf32, #tpu.memory_space<vmem>>, %arg10: memref<4x8x32xf32, #tpu.memory_space<vmem>>) attributes {dimension_semantics = [#tpu.dimension_semantics<parallel>, #tpu.dimension_semantics<arbitrary>], iteration_bounds = array<i64: 2, 3>, scalar_prefetch = 1 : i64, scratch_operands = 2 : i64, tpu.core_type = #tpu.core_type<tc>, window_params = [{transform_indices = @transform_0, window_bounds = array<i64: 4, 8, 32>}, {transform_indices = @transform_1, window_bounds = array<i64: 8, 1>}, {pipeline_mode = #tpu.pipeline_mode<synchronous>, transform_indices = @transform_2, window_bounds = array<i64: 3, 32, 32>}, {pipeline_mode = #tpu.pipeline_mode<synchronous>, transform_indices = @transform_3, window_bounds = array<i64: 3, 32, 32>}, {pipeline_mode = #tpu.pipeline_mode<synchronous>, transform_indices = @transform_4, window_bounds = array<i64: 3, 32>}, {transform_indices = @transform_5, window_bounds = array<i64: 4, 8, 96>}]} {
    %c4_i32 = arith.constant 4 : i32
    %0 = arith.muli %arg1, %c4_i32 : i32
    %1 = arith.index_cast %arg0 : i32 to index
    %2 = memref.load %arg2[%1] : memref<2xi32, #tpu.memory_space<smem>>
    %3 = arith.subi %2, %0 : i32
    %c0_i32 = arith.constant 0 : i32
    %c4_i32_0 = arith.constant 4 : i32
    %4 = arith.maxsi %c0_i32, %3 : i32
    %5 = arith.minsi %c4_i32_0, %4 : i32
    %c0_i32_1 = arith.constant 0 : i32
    %6 = arith.cmpi eq, %arg1, %c0_i32_1 : i32
    %7 = arith.extui %6 : i1 to i32
    %c0_i32_2 = arith.constant 0 : i32
    %8 = arith.cmpi ne, %7, %c0_i32_2 : i32
    scf.if %8 {
      %cst = arith.constant 0.000000e+00 : f32
      %15 = vector.broadcast %cst : f32 to vector<3x8x32xf32>
      %c0 = arith.constant 0 : index
      %c0_7 = arith.constant 0 : index
      %c0_8 = arith.constant 0 : index
      %16 = vector.load %arg9[%c0, %c0_7, %c0_8] : memref<3x8x32xf32, #tpu.memory_space<vmem>>, vector<3x8x32xf32>
      tpu.vector_store %arg9[%c0, %c0_7, %c0_8], %15 {strides = array<i32>} : memref<3x8x32xf32, #tpu.memory_space<vmem>>, vector<3x8x32xf32>,
    } else {
    }
    %c4_i32_3 = arith.constant 4 : i32
    %9 = arith.cmpi slt, %5, %c4_i32_3 : i32
    %10 = arith.extui %9 : i1 to i32
    %c0_i32_4 = arith.constant 0 : i32
    %11 = arith.cmpi ne, %10, %c0_i32_4 : i32
    scf.if %11 {
      %cst = arith.constant 0.000000e+00 : f32
      %15 = vector.broadcast %cst : f32 to vector<4x8x96xf32>
      %c0 = arith.constant 0 : index
      %c0_7 = arith.constant 0 : index
      %c0_8 = arith.constant 0 : index
      %16 = vector.load %arg8[%c0, %c0_7, %c0_8] : memref<4x8x96xf32, #tpu.memory_space<vmem>>, vector<4x8x96xf32>
      tpu.vector_store %arg8[%c0, %c0_7, %c0_8], %15 {strides = array<i32>} : memref<4x8x96xf32, #tpu.memory_space<vmem>>, vector<4x8x96xf32>,
    } else {
    }
    %c0_i32_5 = arith.constant 0 : i32
    %12 = arith.cmpi sgt, %5, %c0_i32_5 : i32
    %13 = arith.extui %12 : i1 to i32
    %c0_i32_6 = arith.constant 0 : i32
    %14 = arith.cmpi ne, %13, %c0_i32_6 : i32
    scf.if %14 {
      %c0 = arith.constant 0 : index
      %c0_7 = arith.constant 0 : index
      %15 = vector.load %arg4[%c0, %c0_7] : memref<8x1xi32, #tpu.memory_space<vmem>>, vector<8x1xi32>
      %c0_8 = arith.constant 0 : index
      %c0_9 = arith.constant 0 : index
      %16 = vector.load %arg7[%c0_8, %c0_9] : memref<3x32xf32, #tpu.memory_space<vmem>>, vector<3x32xf32>
      %17 = vector.extract_strided_slice %16 {offsets = [0, 0], sizes = [1, 32], strides = [1, 1]} : vector<3x32xf32> to vector<1x32xf32>
      %18 = vector.shape_cast %17 : vector<1x32xf32> to vector<1x32xf32>
      %19 = vector.broadcast %18 : vector<1x32xf32> to vector<8x32xf32>
      %20 = vector.extract_strided_slice %16 {offsets = [1, 0], sizes = [1, 32], strides = [1, 1]} : vector<3x32xf32> to vector<1x32xf32>
      %21 = vector.shape_cast %20 : vector<1x32xf32> to vector<1x32xf32>
      %22 = vector.broadcast %21 : vector<1x32xf32> to vector<8x32xf32>
      %23 = vector.extract_strided_slice %16 {offsets = [2, 0], sizes = [1, 32], strides = [1, 1]} : vector<3x32xf32> to vector<1x32xf32>
      %24 = vector.shape_cast %23 : vector<1x32xf32> to vector<1x32xf32>
      %25 = vector.broadcast %24 : vector<1x32xf32> to vector<8x32xf32>
      %c0_10 = arith.constant 0 : index
      %c0_11 = arith.constant 0 : index
      %c0_12 = arith.constant 0 : index
      %26 = vector.load %arg5[%c0_10, %c0_11, %c0_12] : memref<3x32x32xf32, #tpu.memory_space<vmem>>, vector<1x32x32xf32>
      %27 = vector.shape_cast %26 : vector<1x32x32xf32> to vector<32x32xf32>
      %c1 = arith.constant 1 : index
      %c0_13 = arith.constant 0 : index
      %c0_14 = arith.constant 0 : index
      %28 = vector.load %arg5[%c1, %c0_13, %c0_14] : memref<3x32x32xf32, #tpu.memory_space<vmem>>, vector<1x32x32xf32>
      %29 = vector.shape_cast %28 : vector<1x32x32xf32> to vector<32x32xf32>
      %c2 = arith.constant 2 : index
      %c0_15 = arith.constant 0 : index
      %c0_16 = arith.constant 0 : index
      %30 = vector.load %arg5[%c2, %c0_15, %c0_16] : memref<3x32x32xf32, #tpu.memory_space<vmem>>, vector<1x32x32xf32>
      %31 = vector.shape_cast %30 : vector<1x32x32xf32> to vector<32x32xf32>
      %c0_17 = arith.constant 0 : index
      %c0_18 = arith.constant 0 : index
      %c0_19 = arith.constant 0 : index
      %32 = vector.load %arg6[%c0_17, %c0_18, %c0_19] : memref<3x32x32xf32, #tpu.memory_space<vmem>>, vector<1x32x32xf32>
      %33 = vector.shape_cast %32 : vector<1x32x32xf32> to vector<32x32xf32>
      %c1_20 = arith.constant 1 : index
      %c0_21 = arith.constant 0 : index
      %c0_22 = arith.constant 0 : index
      %34 = vector.load %arg6[%c1_20, %c0_21, %c0_22] : memref<3x32x32xf32, #tpu.memory_space<vmem>>, vector<1x32x32xf32>
      %35 = vector.shape_cast %34 : vector<1x32x32xf32> to vector<32x32xf32>
      %c2_23 = arith.constant 2 : index
      %c0_24 = arith.constant 0 : index
      %c0_25 = arith.constant 0 : index
      %36 = vector.load %arg6[%c2_23, %c0_24, %c0_25] : memref<3x32x32xf32, #tpu.memory_space<vmem>>, vector<1x32x32xf32>
      %37 = vector.shape_cast %36 : vector<1x32x32xf32> to vector<32x32xf32>
      %c0_26 = arith.constant 0 : index
      %c0_27 = arith.constant 0 : index
      %c0_28 = arith.constant 0 : index
      %38 = vector.load %arg3[%c0_26, %c0_27, %c0_28] : memref<4x8x32xf32, #tpu.memory_space<vmem>>, vector<4x8x32xf32>
      %39 = vector.shape_cast %38 : vector<4x8x32xf32> to vector<32x32xf32>
      %cst = arith.constant dense<0.000000e+00> : vector<32x32xf32>
      %40 = tpu.matmul %39, %27, %cst {dimension_numbers = #tpu.dot_dimension_numbers<[1], [0], [0], [1], [0, 0, 1, 1], [], []>} : vector<32x32xf32>, vector<32x32xf32>, vector<32x32xf32> -> vector<32x32xf32>
      %41 = vector.shape_cast %40 : vector<32x32xf32> to vector<4x8x32xf32>
      %42 = vector.shape_cast %19 : vector<8x32xf32> to vector<1x8x32xf32>
      %43 = vector.broadcast %42 : vector<1x8x32xf32> to vector<4x8x32xf32>
      %44 = arith.addf %41, %43 : vector<4x8x32xf32>
      %c0_29 = arith.constant 0 : index
      %c0_30 = arith.constant 0 : index
      %c0_31 = arith.constant 0 : index
      %45 = vector.load %arg10[%c0_29, %c0_30, %c0_31] : memref<4x8x32xf32, #tpu.memory_space<vmem>>, vector<4x8x32xf32>
      tpu.vector_store %arg10[%c0_29, %c0_30, %c0_31], %44 {strides = array<i32>} : memref<4x8x32xf32, #tpu.memory_space<vmem>>, vector<4x8x32xf32>,
      %c0_32 = arith.constant 0 : index
      %c0_33 = arith.constant 0 : index
      %c0_34 = arith.constant 0 : index
      %46 = vector.load %arg9[%c0_32, %c0_33, %c0_34] : memref<3x8x32xf32, #tpu.memory_space<vmem>>, vector<1x8x32xf32>
      %47 = vector.shape_cast %46 : vector<1x8x32xf32> to vector<8x32xf32>
      %c1_35 = arith.constant 1 : index
      %c0_36 = arith.constant 0 : index
      %c0_37 = arith.constant 0 : index
      %48 = vector.load %arg9[%c1_35, %c0_36, %c0_37] : memref<3x8x32xf32, #tpu.memory_space<vmem>>, vector<1x8x32xf32>
      %49 = vector.shape_cast %48 : vector<1x8x32xf32> to vector<8x32xf32>
      %c2_38 = arith.constant 2 : index
      %c0_39 = arith.constant 0 : index
      %c0_40 = arith.constant 0 : index
      %50 = vector.load %arg9[%c2_38, %c0_39, %c0_40] : memref<3x8x32xf32, #tpu.memory_space<vmem>>, vector<1x8x32xf32>
      %51 = vector.shape_cast %50 : vector<1x8x32xf32> to vector<8x32xf32>
      %c0_i32_41 = arith.constant 0 : i32
      %52 = arith.subi %5, %c0_i32_41 : i32
      %53 = arith.addi %c0_i32_41, %52 : i32
      %c1_i32 = arith.constant 1 : i32
      %54:3 = scf.for %arg11 = %c0_i32_41 to %53 step %c1_i32 iter_args(%arg12 = %47, %arg13 = %49, %arg14 = %51) -> (vector<8x32xf32>, vector<8x32xf32>, vector<8x32xf32>)  : i32 {
        %64 = arith.addi %0, %arg11 : i32
        %65 = vector.broadcast %64 : i32 to vector<8x1xi32>
        %66 = arith.cmpi slt, %65, %15 : vector<8x1xi32>
        %cst_51 = arith.constant dense<0.000000e+00> : vector<8x32xf32>
        %67 = tpu.matmul %arg12, %33, %cst_51 {dimension_numbers = #tpu.dot_dimension_numbers<[1], [0], [0], [1], [0, 0, 1, 1], [], []>} : vector<8x32xf32>, vector<32x32xf32>, vector<8x32xf32> -> vector<8x32xf32>
        %68 = arith.index_cast %arg11 : i32 to index
        %c0_52 = arith.constant 0 : index
        %c0_53 = arith.constant 0 : index
        %69 = vector.load %arg10[%68, %c0_52, %c0_53] : memref<4x8x32xf32, #tpu.memory_space<vmem>>, vector<1x8x32xf32>
        %70 = vector.shape_cast %69 : vector<1x8x32xf32> to vector<8x32xf32>
        %71 = arith.addf %70, %67 : vector<8x32xf32>
        %72 = math.tanh %71 : vector<8x32xf32>
        %73 = vector.shape_cast %66 : vector<8x1xi1> to vector<8x1xi1>
        %74 = vector.broadcast %73 : vector<8x1xi1> to vector<8x32xi1>
        %75 = arith.select %74, %72, %arg12 : vector<8x32xi1>, vector<8x32xf32>
        %cst_54 = arith.constant dense<0.000000e+00> : vector<8x32xf32>
        %76 = tpu.matmul %arg13, %35, %cst_54 {dimension_numbers = #tpu.dot_dimension_numbers<[1], [0], [0], [1], [0, 0, 1, 1], [], []>} : vector<8x32xf32>, vector<32x32xf32>, vector<8x32xf32> -> vector<8x32xf32>
        %cst_55 = arith.constant dense<0.000000e+00> : vector<8x32xf32>
        %77 = tpu.matmul %75, %29, %cst_55 {dimension_numbers = #tpu.dot_dimension_numbers<[1], [0], [0], [1], [0, 0, 1, 1], [], []>} : vector<8x32xf32>, vector<32x32xf32>, vector<8x32xf32> -> vector<8x32xf32>
        %78 = arith.addf %77, %76 : vector<8x32xf32>
        %79 = arith.addf %78, %22 : vector<8x32xf32>
        %80 = math.tanh %79 : vector<8x32xf32>
        %81 = vector.shape_cast %66 : vector<8x1xi1> to vector<8x1xi1>
        %82 = vector.broadcast %81 : vector<8x1xi1> to vector<8x32xi1>
        %83 = arith.select %82, %80, %arg13 : vector<8x32xi1>, vector<8x32xf32>
        %cst_56 = arith.constant dense<0.000000e+00> : vector<8x32xf32>
        %84 = tpu.matmul %arg14, %37, %cst_56 {dimension_numbers = #tpu.dot_dimension_numbers<[1], [0], [0], [1], [0, 0, 1, 1], [], []>} : vector<8x32xf32>, vector<32x32xf32>, vector<8x32xf32> -> vector<8x32xf32>
        %cst_57 = arith.constant dense<0.000000e+00> : vector<8x32xf32>
        %85 = tpu.matmul %83, %31, %cst_57 {dimension_numbers = #tpu.dot_dimension_numbers<[1], [0], [0], [1], [0, 0, 1, 1], [], []>} : vector<8x32xf32>, vector<32x32xf32>, vector<8x32xf32> -> vector<8x32xf32>
        %86 = arith.addf %85, %84 : vector<8x32xf32>
        %87 = arith.addf %86, %25 : vector<8x32xf32>
        %88 = math.tanh %87 : vector<8x32xf32>
        %89 = vector.shape_cast %66 : vector<8x1xi1> to vector<8x1xi1>
        %90 = vector.broadcast %89 : vector<8x1xi1> to vector<8x32xi1>
        %91 = arith.select %90, %88, %arg14 : vector<8x32xi1>, vector<8x32xf32>
        %cst_58 = arith.constant 0.000000e+00 : f32
        %92 = vector.shape_cast %66 : vector<8x1xi1> to vector<8x1xi1>
        %93 = vector.broadcast %92 : vector<8x1xi1> to vector<8x32xi1>
        %94 = vector.broadcast %cst_58 : f32 to vector<8x32xf32>
        %95 = arith.select %93, %75, %94 : vector<8x32xi1>, vector<8x32xf32>
        %96 = arith.index_cast %arg11 : i32 to index
        %c0_59 = arith.constant 0 : index
        %c0_60 = arith.constant 0 : index
        %97 = vector.load %arg8[%96, %c0_59, %c0_60] : memref<4x8x96xf32, #tpu.memory_space<vmem>>, vector<1x8x32xf32>
        %98 = vector.shape_cast %97 : vector<1x8x32xf32> to vector<8x32xf32>
        %99 = vector.shape_cast %95 : vector<8x32xf32> to vector<1x8x32xf32>
        tpu.vector_store %arg8[%96, %c0_59, %c0_60], %99 {strides = array<i32>} : memref<4x8x96xf32, #tpu.memory_space<vmem>>, vector<1x8x32xf32>,
        %cst_61 = arith.constant 0.000000e+00 : f32
        %100 = vector.shape_cast %66 : vector<8x1xi1> to vector<8x1xi1>
        %101 = vector.broadcast %100 : vector<8x1xi1> to vector<8x32xi1>
        %102 = vector.broadcast %cst_61 : f32 to vector<8x32xf32>
        %103 = arith.select %101, %83, %102 : vector<8x32xi1>, vector<8x32xf32>
        %104 = arith.index_cast %arg11 : i32 to index
        %c0_62 = arith.constant 0 : index
        %c32 = arith.constant 32 : index
        %105 = vector.load %arg8[%104, %c0_62, %c32] : memref<4x8x96xf32, #tpu.memory_space<vmem>>, vector<1x8x32xf32>
        %106 = vector.shape_cast %105 : vector<1x8x32xf32> to vector<8x32xf32>
        %107 = vector.shape_cast %103 : vector<8x32xf32> to vector<1x8x32xf32>
        tpu.vector_store %arg8[%104, %c0_62, %c32], %107 {strides = array<i32>} : memref<4x8x96xf32, #tpu.memory_space<vmem>>, vector<1x8x32xf32>,
        %cst_63 = arith.constant 0.000000e+00 : f32
        %108 = vector.shape_cast %66 : vector<8x1xi1> to vector<8x1xi1>
        %109 = vector.broadcast %108 : vector<8x1xi1> to vector<8x32xi1>
        %110 = vector.broadcast %cst_63 : f32 to vector<8x32xf32>
        %111 = arith.select %109, %91, %110 : vector<8x32xi1>, vector<8x32xf32>
        %112 = arith.index_cast %arg11 : i32 to index
        %c0_64 = arith.constant 0 : index
        %c64 = arith.constant 64 : index
        %113 = vector.load %arg8[%112, %c0_64, %c64] : memref<4x8x96xf32, #tpu.memory_space<vmem>>, vector<1x8x32xf32>
        %114 = vector.shape_cast %113 : vector<1x8x32xf32> to vector<8x32xf32>
        %115 = vector.shape_cast %111 : vector<8x32xf32> to vector<1x8x32xf32>
        tpu.vector_store %arg8[%112, %c0_64, %c64], %115 {strides = array<i32>} : memref<4x8x96xf32, #tpu.memory_space<vmem>>, vector<1x8x32xf32>,
        scf.yield %75, %83, %91 : vector<8x32xf32>, vector<8x32xf32>, vector<8x32xf32>
      }
      %c0_42 = arith.constant 0 : index
      %c0_43 = arith.constant 0 : index
      %c0_44 = arith.constant 0 : index
      %55 = vector.load %arg9[%c0_42, %c0_43, %c0_44] : memref<3x8x32xf32, #tpu.memory_space<vmem>>, vector<1x8x32xf32>
      %56 = vector.shape_cast %55 : vector<1x8x32xf32> to vector<8x32xf32>
      %57 = vector.shape_cast %54#0 : vector<8x32xf32> to vector<1x8x32xf32>
      tpu.vector_store %arg9[%c0_42, %c0_43, %c0_44], %57 {strides = array<i32>} : memref<3x8x32xf32, #tpu.memory_space<vmem>>, vector<1x8x32xf32>,
      %c1_45 = arith.constant 1 : index
      %c0_46 = arith.constant 0 : index
      %c0_47 = arith.constant 0 : index
      %58 = vector.load %arg9[%c1_45, %c0_46, %c0_47] : memref<3x8x32xf32, #tpu.memory_space<vmem>>, vector<1x8x32xf32>
      %59 = vector.shape_cast %58 : vector<1x8x32xf32> to vector<8x32xf32>
      %60 = vector.shape_cast %54#1 : vector<8x32xf32> to vector<1x8x32xf32>
      tpu.vector_store %arg9[%c1_45, %c0_46, %c0_47], %60 {strides = array<i32>} : memref<3x8x32xf32, #tpu.memory_space<vmem>>, vector<1x8x32xf32>,
      %c2_48 = arith.constant 2 : index
      %c0_49 = arith.constant 0 : index
      %c0_50 = arith.constant 0 : index
      %61 = vector.load %arg9[%c2_48, %c0_49, %c0_50] : memref<3x8x32xf32, #tpu.memory_space<vmem>>, vector<1x8x32xf32>
      %62 = vector.shape_cast %61 : vector<1x8x32xf32> to vector<8x32xf32>
      %63 = vector.shape_cast %54#2 : vector<8x32xf32> to vector<1x8x32xf32>
      tpu.vector_store %arg9[%c2_48, %c0_49, %c0_50], %63 {strides = array<i32>} : memref<3x8x32xf32, #tpu.memory_space<vmem>>, vector<1x8x32xf32>,
    } else {
    }
    return
  }
  func.func @transform_0(%arg0: i32, %arg1: i32, %arg2: memref<2xi32, #tpu.memory_space<smem>>) -> (i32, i32, i32) {
    %c0_i32 = arith.constant 0 : i32
    %c0_i32_0 = arith.constant 0 : i32
    return %arg1, %arg0, %c0_i32 : i32, i32, i32
  }
  func.func @transform_1(%arg0: i32, %arg1: i32, %arg2: memref<2xi32, #tpu.memory_space<smem>>) -> (i32, i32) {
    %c0_i32 = arith.constant 0 : i32
    %c0_i32_0 = arith.constant 0 : i32
    return %arg0, %c0_i32 : i32, i32
  }
  func.func @transform_2(%arg0: i32, %arg1: i32, %arg2: memref<2xi32, #tpu.memory_space<smem>>) -> (i32, i32, i32) {
    %c0_i32 = arith.constant 0 : i32
    %c0_i32_0 = arith.constant 0 : i32
    %c0_i32_1 = arith.constant 0 : i32
    %c0_i32_2 = arith.constant 0 : i32
    return %c0_i32, %c0_i32_0, %c0_i32_1 : i32, i32, i32
  }
  func.func @transform_3(%arg0: i32, %arg1: i32, %arg2: memref<2xi32, #tpu.memory_space<smem>>) -> (i32, i32, i32) {
    %c0_i32 = arith.constant 0 : i32
    %c0_i32_0 = arith.constant 0 : i32
    %c0_i32_1 = arith.constant 0 : i32
    %c0_i32_2 = arith.constant 0 : i32
    return %c0_i32, %c0_i32_0, %c0_i32_1 : i32, i32, i32
  }
  func.func @transform_4(%arg0: i32, %arg1: i32, %arg2: memref<2xi32, #tpu.memory_space<smem>>) -> (i32, i32) {
    %c0_i32 = arith.constant 0 : i32
    %c0_i32_0 = arith.constant 0 : i32
    %c0_i32_1 = arith.constant 0 : i32
    return %c0_i32, %c0_i32_0 : i32, i32
  }
  func.func @transform_5(%arg0: i32, %arg1: i32, %arg2: memref<2xi32, #tpu.memory_space<smem>>) -> (i32, i32, i32) {
    %c0_i32 = arith.constant 0 : i32
    %c0_i32_0 = arith.constant 0 : i32
    return %arg1, %arg0, %c0_i32 : i32, i32, i32
  }
}

</mosaic_0001>

<llo_original>
// kernel: tpu_custom_call.1
$region0: #{tpu_custom_call.1}
  #allocation0 [shape = 'u32[]', space=smem, size = 0x4, offset = 0x4, fixed_abs, tag = 'smem constant byte address 0x4 - core index']
  #allocation1 [shape = 'u32[144,128]{1,0:T(1,128)}', space=vmem, size = 0x12000, scoped, tag = 'internal scratch']
  #allocation2 [shape = 'f32[3,8,32]{2,1,0:T(8,128)}', space=vmem, size = 0x3000, scoped, tag = 'scratch operand']
  #allocation3 [shape = 'f32[4,8,32]{2,1,0:T(8,128)}', space=vmem, size = 0x4000, scoped, tag = 'scratch operand']
  #allocation4 [shape = 's32[1]{0}', space=sflag, size = 0x4, scoped, tag = 'scoped memory for tpu_custom_call.1']
  #allocation5 [shape = 'u8[512]{0}', space=smem, size = 0x200, scoped, tag = 'prefetched SMEM operand 0']
  %s0 = inlined_call_operand.vmem [shape: s32[2], index: 0, kind: input, shape index: {}]
  %s1 = inlined_call_operand.hbm [shape: f32[12,16,32], index: 1, kind: input, shape index: {}]
  %s2 = inlined_call_operand.vmem [shape: s32[16,1], index: 2, kind: input, shape index: {}]
  %s3 = inlined_call_operand.hbm [shape: f32[3,32,32], index: 3, kind: input, shape index: {}]
  %s4 = inlined_call_operand.hbm [shape: f32[3,32,32], index: 4, kind: input, shape index: {}]
  %s5 = inlined_call_operand.vmem [shape: f32[3,32], index: 5, kind: input, shape index: {}]
  %s6 = inlined_call_operand.hbm [shape: f32[12,16,96], index: 6, kind: output, shape index: {}]
  %s7 = sld [smem:[#allocation0]]
  $region84: #{tpu_custom_call.1} parent=0
    _
  %s9 = ssub.s32 1, %s7
  %s10 = scalar_select 0, %s9, %s7
  %s11 = sshll.u32 %s0, 4
  %s12 = int_to_ptr.vmem [resolvable:$true] %s11
  %14 = dma.vmem_to_smem %s12, 16, [#allocation5], [#allocation4]
  %15 = dma.done [#allocation4], 16
  %16 = sfence
  $region1: #{tpu_custom_call.1} parent=0
    #allocation6 [shape = 'u8[32768]{0}', space=vmem, size = 0x8000, scoped, tag = 'input window, operand 1']
    #allocation7 [shape = 's32[2]{0}', space=sflag, size = 0x8, scoped, tag = 'scoped memory for tpu_custom_call.1']
    #allocation8 [shape = 's32[2]{0}', space=sflag, size = 0x8, scoped, tag = 'scoped memory for tpu_custom_call.1']
    #allocation9 [shape = 'u8[49152]{0}', space=vmem, size = 0xc000, scoped, tag = 'input window, operand 3, single buffered']
    #allocation10 [shape = 's32[1]{0}', space=sflag, size = 0x4, scoped, tag = 'scoped memory for tpu_custom_call.1']
    #allocation11 [shape = 'u8[49152]{0}', space=vmem, size = 0xc000, scoped, tag = 'input window, operand 4, single buffered']
    #allocation12 [shape = 'u8[32768]{0}', space=vmem, size = 0x8000, scoped, tag = 'output window, operand 0']
    %17 = vsyncpa [#allocation7], 0
    %s18 = scalar_lea.sflag [#allocation7], 1
    %19 = vsyncpa %s18, 0
    %20 = vsyncpa [#allocation10], 0
    %21 = vsyncpa [#allocation8], 0
    %s22 = scalar_lea.sflag [#allocation8], 1
    %23 = vsyncpa %s22, 0
    loop: start=0, step=1, limit=8
    $region2: #{tpu_custom_call.1} parent=1 // loop_pre_header
      _
    $region3: #{tpu_custom_call.1} parent=1 // loop_header
      %s25 = sphi 0, %s29
      %p26 = scmp.ge.s32.totalorder %s25, 8
      %s32 = sphi 0, %s44
      %s33 = sphi 0, %s40
      %s34 = sphi 0, %s32
      %s35 = sphi 0, %s33
      %s36 = sphi 0, %s34
      %s37 = sphi 0, %s35
      %s49 = sphi 0, %s51
      %s52 = sphi 0, %s49
      %s53 = sphi 0, %s52
      %s69 = sphi 0, %s53
      %s75 = sphi 0, %s77
      %s78 = sphi 0, %s75
      %s79 = sphi 0, %s78
      %s95 = sphi 0, %s79
      %s99 = sphi 0, %s99
      %s101 = sphi 0, %s99
      %s102 = sphi 0, %s101
      %s116 = sphi 0, %s102
      %s120 = sphi 0, %s120
      %s122 = sphi 0, %s120
      %s123 = sphi 0, %s122
      %s137 = sphi 0, %s123
      %s141 = sphi 0, %s141
      %s143 = sphi 0, %s141
      %s144 = sphi 0, %s143
      %s158 = sphi 0, %s144
      %s166 = sphi 0, %s168
      %s169 = sphi 0, %s166
      %s170 = sphi 0, %s169
      %s186 = sphi 0, %s170
    $region4: #{tpu_custom_call.1} parent=1 // loop_header_branch
      %28 = sbr.rel (%p26) target = $region8
    $region5: #{tpu_custom_call.1} parent=1 // loop_body
      %s30 = ssub.s32 %s25, 1
      %s31 = ssub.s32 %s25, 2
      %s38 = sadd.s32 1, %s33
      %p39 = scmp.ge.s32.totalorder %s38, 3
      %s40 = scalar_select %p39, 0, %s38
      %s41 = sadd.s32 1, %s32
      %s42 = scalar_select %p39, %s41, %s32
      %p43 = scmp.ge.s32.totalorder %s42, 2
      %s44 = scalar_select %p43, 0, %s42
      %s45 = ssub.s32 %s33, %s40
      %s46 = ssub.s32 %s32, %s44
      %s47 = sor.u32 %s45, %s46
      %p48 = scmp.eq.s32.totalorder %s47, 0
      %s50 = sadd.s32 %s49, 1
      %s51 = scalar_select %p48, %s49, %s50
      %p54 = pneg %p48
      %p55 = scmp.eq.s32.totalorder %s25, 5
      %p56 = por %p54, %p55
      %p57 = scmp.ne.s32.totalorder %s49, %s52
      %p58 = scmp.eq.s32.totalorder %s25, 0
      %p59 = por %p57, %p58
      %p60 = scmp.ne.s32.totalorder %s49, %s52
      %p61 = scmp.eq.s32.totalorder %s30, 5
      %p62 = por %p60, %p61
      %p63 = scmp.ne.s32.totalorder %s52, %s53
      %p64 = scmp.eq.s32.totalorder %s30, 0
      %p65 = por %p63, %p64
      %p66 = scmp.ne.s32.totalorder %s52, %s53
      %p67 = scmp.eq.s32.totalorder %s31, 5
      %p68 = por %p66, %p67
      %p70 = scmp.ne.s32.totalorder %s53, %s69
      %p71 = scmp.eq.s32.totalorder %s31, 0
      %p72 = por %p70, %p71
      %s73 = ssub.s32 %s32, %s44
      %p74 = scmp.eq.s32.totalorder %s73, 0
      %s76 = sadd.s32 %s75, 1
      %s77 = scalar_select %p74, %s75, %s76
      %p80 = pneg %p74
      %p81 = scmp.eq.s32.totalorder %s25, 5
      %p82 = por %p80, %p81
      %p83 = scmp.ne.s32.totalorder %s75, %s78
      %p84 = scmp.eq.s32.totalorder %s25, 0
      %p85 = por %p83, %p84
      %p86 = scmp.ne.s32.totalorder %s75, %s78
      %p87 = scmp.eq.s32.totalorder %s30, 5
      %p88 = por %p86, %p87
      %p89 = scmp.ne.s32.totalorder %s78, %s79
      %p90 = scmp.eq.s32.totalorder %s30, 0
      %p91 = por %p89, %p90
      %p92 = scmp.ne.s32.totalorder %s78, %s79
      %p93 = scmp.eq.s32.totalorder %s31, 5
      %p94 = por %p92, %p93
      %p96 = scmp.ne.s32.totalorder %s79, %s95
      %p97 = scmp.eq.s32.totalorder %s31, 0
      %p98 = por %p96, %p97
      %s100 = sadd.s32 %s99, 1
      %p103 = scmp.eq.s32.totalorder %s25, 5
      %p104 = scmp.ne.s32.totalorder %s99, %s101
      %p105 = scmp.eq.s32.totalorder %s25, 0
      %p106 = por %p104, %p105
      %p107 = scmp.ne.s32.totalorder %s99, %s101
      %p108 = scmp.eq.s32.totalorder %s30, 5
      %p109 = por %p107, %p108
      %p110 = scmp.ne.s32.totalorder %s101, %s102
      %p111 = scmp.eq.s32.totalorder %s30, 0
      %p112 = por %p110, %p111
      %p113 = scmp.ne.s32.totalorder %s101, %s102
      %p114 = scmp.eq.s32.totalorder %s31, 5
      %p115 = por %p113, %p114
      %p117 = scmp.ne.s32.totalorder %s102, %s116
      %p118 = scmp.eq.s32.totalorder %s31, 0
      %p119 = por %p117, %p118
      %s121 = sadd.s32 %s120, 1
      %p124 = scmp.eq.s32.totalorder %s25, 5
      %p125 = scmp.ne.s32.totalorder %s120, %s122
      %p126 = scmp.eq.s32.totalorder %s25, 0
      %p127 = por %p125, %p126
      %p128 = scmp.ne.s32.totalorder %s120, %s122
      %p129 = scmp.eq.s32.totalorder %s30, 5
      %p130 = por %p128, %p129
      %p131 = scmp.ne.s32.totalorder %s122, %s123
      %p132 = scmp.eq.s32.totalorder %s30, 0
      %p133 = por %p131, %p132
      %p134 = scmp.ne.s32.totalorder %s122, %s123
      %p135 = scmp.eq.s32.totalorder %s31, 5
      %p136 = por %p134, %p135
      %p138 = scmp.ne.s32.totalorder %s123, %s137
      %p139 = scmp.eq.s32.totalorder %s31, 0
      %p140 = por %p138, %p139
      %s142 = sadd.s32 %s141, 1
      %p145 = scmp.eq.s32.totalorder %s25, 5
      %p146 = scmp.ne.s32.totalorder %s141, %s143
      %p147 = scmp.eq.s32.totalorder %s25, 0
      %p148 = por %p146, %p147
      %p149 = scmp.ne.s32.totalorder %s141, %s143
      %p150 = scmp.eq.s32.totalorder %s30, 5
      %p151 = por %p149, %p150
      %p152 = scmp.ne.s32.totalorder %s143, %s144
      %p153 = scmp.eq.s32.totalorder %s30, 0
      %p154 = por %p152, %p153
      %p155 = scmp.ne.s32.totalorder %s143, %s144
      %p156 = scmp.eq.s32.totalorder %s31, 5
      %p157 = por %p155, %p156
      %p159 = scmp.ne.s32.totalorder %s144, %s158
      %p160 = scmp.eq.s32.totalorder %s31, 0
      %p161 = por %p159, %p160
      %s162 = ssub.s32 %s33, %s40
      %s163 = ssub.s32 %s32, %s44
      %s164 = sor.u32 %s162, %s163
      %p165 = scmp.eq.s32.totalorder %s164, 0
      %s167 = sadd.s32 %s166, 1
      %s168 = scalar_select %p165, %s166, %s167
      %p171 = pneg %p165
      %p172 = scmp.eq.s32.totalorder %s25, 5
      %p173 = por %p171, %p172
      %p174 = scmp.ne.s32.totalorder %s166, %s169
      %p175 = scmp.eq.s32.totalorder %s25, 0
      %p176 = por %p174, %p175
      %p177 = scmp.ne.s32.totalorder %s166, %s169
      %p178 = scmp.eq.s32.totalorder %s30, 5
      %p179 = por %p177, %p178
      %p180 = scmp.ne.s32.totalorder %s169, %s170
      %p181 = scmp.eq.s32.totalorder %s30, 0
      %p182 = por %p180, %p181
      %p183 = scmp.ne.s32.totalorder %s169, %s170
      %p184 = scmp.eq.s32.totalorder %s31, 5
      %p185 = por %p183, %p184
      %p187 = scmp.ne.s32.totalorder %s170, %s186
      %p188 = scmp.eq.s32.totalorder %s31, 0
      %p189 = por %p187, %p188
      %p190 = scmp.le.s32.totalorder 1, %s25
      %p191 = scmp.lt.s32.totalorder %s25, 7
      %p192 = pnand %p190, %p191
      %p193 = pneg %p192
      // Predicated region
      $region9: #{tpu_custom_call.1} parent=5 // pred_check
        _
      $region10: #{tpu_custom_call.1} parent=5 // pred_check_branch
        %195 = sbr.rel (%p192) target = $region12
      $region11: #{tpu_custom_call.1} parent=5 // pred_region
        %s196 = ssub.s32 %s25, 1
        // Predicated region
        $region13: #{tpu_custom_call.1} parent=11 // pred_check
          %p197 = pneg %p112
        $region14: #{tpu_custom_call.1} parent=11 // pred_check_branch
          %199 = sbr.rel (%p197) target = $region16
        $region15: #{tpu_custom_call.1} parent=11 // pred_region
          %s201 = ssub.s32 1536, 1536
          %202 = vsyncadd [#allocation10], %s201
          %s203 = sshll.u32 [#allocation9], 4
          %s204 = int_to_ptr.vmem [resolvable:$true] %s203
          %209 = dma.hbm_to_vmem [thread:$0]  %s3, 1536, %s204, [#allocation10], 128, 128, 8
        $region16: #{tpu_custom_call.1} parent=11 // pred_fallthru
          _
        // Predicated region
        $region17: #{tpu_custom_call.1} parent=11 // pred_check
          %p210 = pneg %p133
        $region18: #{tpu_custom_call.1} parent=11 // pred_check_branch
          %212 = sbr.rel (%p210) target = $region20
        $region19: #{tpu_custom_call.1} parent=11 // pred_region
          %s214 = ssub.s32 1536, 1536
          %215 = vsyncadd [#allocation10], %s214
          %s216 = sshll.u32 [#allocation11], 4
          %s217 = int_to_ptr.vmem [resolvable:$true] %s216
          %222 = dma.hbm_to_vmem [thread:$0]  %s4, 1536, %s217, [#allocation10], 128, 128, 8
        $region20: #{tpu_custom_call.1} parent=11 // pred_fallthru
          _
        // Predicated region
        $region21: #{tpu_custom_call.1} parent=11 // pred_check
          %p223 = pneg %p154
        $region22: #{tpu_custom_call.1} parent=11 // pred_check_branch
          %225 = sbr.rel (%p223) target = $region24
        $region23: #{tpu_custom_call.1} parent=11 // pred_region
          _
        $region24: #{tpu_custom_call.1} parent=11 // pred_fallthru
          _
      $region12: #{tpu_custom_call.1} parent=5 // pred_fallthru
        _
      %p226 = scmp.lt.s32.totalorder %s25, 6
      // Predicated region
      $region25: #{tpu_custom_call.1} parent=5 // pred_check
        %p227 = pneg %p226
      $region26: #{tpu_custom_call.1} parent=5 // pred_check_branch
        %229 = sbr.rel (%p227) target = $region28
      $region27: #{tpu_custom_call.1} parent=5 // pred_region
        // Predicated region
        $region29: #{tpu_custom_call.1} parent=27 // pred_check
          %p230 = pneg %p59
        $region30: #{tpu_custom_call.1} parent=27 // pred_check_branch
          %232 = sbr.rel (%p230) target = $region32
        $region31: #{tpu_custom_call.1} parent=27 // pred_region
          %s233 = sand.u32 %s49, 1
          %s234 = scalar_lea.sflag [#allocation7], %s233
          %s235 = sand.u32 %s49, 1
          %s236 = smul.addr %s235, 32
          %s237 = scalar_lea.vmem [#allocation6], %s236
          %s238 = smul.u32 4, %s33
          %s240 = ssub.s32 512, 512
          %241 = vsyncadd %s234, %s240
          %s242 = smul.addr %s238, 2
          %s243 = sadd.s32 %s32, %s242
          %s244 = smul.addr %s243, 128
          %s245 = scalar_lea.hbm %s1, %s244
          %s246 = sshll.u32 %s237, 4
          %s247 = int_to_ptr.vmem [resolvable:$true] %s246
          %252 = dma.hbm_to_vmem [thread:$0]  %s245, 512, %s247, %s234, 256, 128, 8
        $region32: #{tpu_custom_call.1} parent=27 // pred_fallthru
          _
        // Predicated region
        $region33: #{tpu_custom_call.1} parent=27 // pred_check
          %p253 = pneg %p85
        $region34: #{tpu_custom_call.1} parent=27 // pred_check_branch
          %255 = sbr.rel (%p253) target = $region36
        $region35: #{tpu_custom_call.1} parent=27 // pred_region
          %p256 = scmp.lt.s32.totalorder %s32, 1
          %s257 = scalar_select %p256, %s32, 1
          %s258 = smul.addr %s257, 8
          %s259 = scalar_lea.vmem %s2, %s258
        $region36: #{tpu_custom_call.1} parent=27 // pred_fallthru
          _
      $region28: #{tpu_custom_call.1} parent=5 // pred_fallthru
        _
      %p260 = scmp.le.s32.totalorder 1, %s25
      %p261 = scmp.lt.s32.totalorder %s25, 7
      %p262 = pnand %p260, %p261
      %p263 = pneg %p262
      // Predicated region
      $region37: #{tpu_custom_call.1} parent=5 // pred_check
        _
      $region38: #{tpu_custom_call.1} parent=5 // pred_check_branch
        %265 = sbr.rel (%p262) target = $region40
      $region39: #{tpu_custom_call.1} parent=5 // pred_region
        %s266 = ssub.s32 %s25, 1
        %s267 = sand.u32 %s52, 1
        %s268 = scalar_lea.sflag [#allocation7], %s267
        %s269 = sand.u32 %s52, 1
        %s270 = smul.addr %s269, 32
        %s271 = scalar_lea.vmem [#allocation6], %s270
        // Predicated region
        $region41: #{tpu_custom_call.1} parent=39 // pred_check
          %p272 = pneg %p65
        $region42: #{tpu_custom_call.1} parent=39 // pred_check_branch
          %274 = sbr.rel (%p272) target = $region44
        $region43: #{tpu_custom_call.1} parent=39 // pred_region
          %275 = dma.done %s268, 512
        $region44: #{tpu_custom_call.1} parent=39 // pred_fallthru
          _
        // Predicated region
        $region45: #{tpu_custom_call.1} parent=39 // pred_check
          %p276 = pneg %p112
        $region46: #{tpu_custom_call.1} parent=39 // pred_check_branch
          %278 = sbr.rel (%p276) target = $region48
        $region47: #{tpu_custom_call.1} parent=39 // pred_region
          %279 = dma.done [#allocation10], 1536
        $region48: #{tpu_custom_call.1} parent=39 // pred_fallthru
          _
        // Predicated region
        $region49: #{tpu_custom_call.1} parent=39 // pred_check
          %p280 = pneg %p133
        $region50: #{tpu_custom_call.1} parent=39 // pred_check_branch
          %282 = sbr.rel (%p280) target = $region52
        $region51: #{tpu_custom_call.1} parent=39 // pred_region
          %283 = dma.done [#allocation10], 1536
        $region52: #{tpu_custom_call.1} parent=39 // pred_fallthru
          _
        %s284 = sand.u32 %s52, 1
        %s285 = scalar_lea.sflag [#allocation7], %s284
        %s286 = sand.u32 %s52, 1
        %s287 = smul.addr %s286, 32
        %s288 = scalar_lea.vmem [#allocation6], %s287
        %p289 = pneg %p65
        %p290 = pneg %p62
        %p291 = scmp.lt.s32.totalorder %s34, 1
        %s292 = scalar_select %p291, %s34, 1
        %s293 = smul.addr %s292, 8
        %s294 = scalar_lea.vmem %s2, %s293
        %p295 = pneg %p91
        %p296 = pneg %p88
        %p297 = pneg %p112
        %p298 = pneg %p109
        %p299 = pneg %p133
        %p300 = pneg %p130
        %p301 = pneg %p154
        %p302 = pneg %p151
        %p303 = pneg %p182
        %p304 = pneg %p179
        %s305 = sand.u32 %s169, 1
        %s306 = scalar_lea.sflag [#allocation8], %s305
        %s307 = sand.u32 %s169, 1
        %s308 = smul.addr %s307, 32
        %s309 = scalar_lea.vmem [#allocation12], %s308
        %s310 = smul.u32 4, %s35
        %p311 = scmp.lt.s32.totalorder %s34, 1
        %s312 = scalar_select %p311, %s34, 1
        %s313 = smul.addr %s312, 8
        %s314 = scalar_lea.vmem %s2, %s313
        %s315 = smul.u32 4, %s35
        %s316 = smul.u32 %s35, 4
        %s317 = sld [smem:[#allocation5 + %s34]]
        %s318 = ssub.s32 %s317, %s316
        %p319 = scmp.gt.s32.totalorder %s318, 0
        %s320 = scalar_select %p319, %s318, 0
        %p321 = scmp.lt.s32.totalorder %s320, 4
        %s322 = scalar_select %p321, %s320, 4
        %p323 = scmp.eq.s32.totalorder %s35, 0
        // Predicated region
        $region53: #{tpu_custom_call.1} parent=39 // pred_check
          %p324 = pneg %p323
        $region54: #{tpu_custom_call.1} parent=39 // pred_check_branch
          %326 = sbr.rel (%p324) target = $region56
        $region55: #{tpu_custom_call.1} parent=39 // pred_region
          %vm327 = vcmask 261120
          %328 = vst.msk [vmem:[#allocation2] sm:$0xff] %vm327, 0.0
          %329 = vst.msk [vmem:[#allocation2 + $0x8] sm:$0xff] %vm327, 0.0
          %330 = vst.msk [vmem:[#allocation2 + $0x10] sm:$0xff] %vm327, 0.0
        $region56: #{tpu_custom_call.1} parent=39 // pred_fallthru
          _
        %p331 = scmp.lt.s32.totalorder %s322, 4
        // Predicated region
        $region57: #{tpu_custom_call.1} parent=39 // pred_check
          %p332 = pneg %p331
        $region58: #{tpu_custom_call.1} parent=39 // pred_check_branch
          %334 = sbr.rel (%p332) target = $region60
        $region59: #{tpu_custom_call.1} parent=39 // pred_region
          %vm335 = vcmask 785408
          %336 = vst.msk [vmem:[%s309] sm:$0xff] %vm335, 0.0
          %337 = vst.msk [vmem:[%s309 + $0x8] sm:$0xff] %vm335, 0.0
          %338 = vst.msk [vmem:[%s309 + $0x10] sm:$0xff] %vm335, 0.0
          %339 = vst.msk [vmem:[%s309 + $0x18] sm:$0xff] %vm335, 0.0
        $region60: #{tpu_custom_call.1} parent=39 // pred_fallthru
          _
        %p340 = scmp.gt.s32.totalorder %s322, 0
        // Predicated region
        $region61: #{tpu_custom_call.1} parent=39 // pred_check
          %p341 = pneg %p340
        $region62: #{tpu_custom_call.1} parent=39 // pred_check_branch
          %343 = sbr.rel (%p341) target = $region64
        $region63: #{tpu_custom_call.1} parent=39 // pred_region
          %v344 = vld [vmem:[%s314] sm:$0xff]
          %v345 = vld [vmem:[%s5] sm:$0x7]
          %v346 = vlaneseq
          %v347 = vshrl.u32 %v346, 7
          %v348 = vsub.s32 1, %v347
          %v349 = vrot.slane %v345, %v348
          %v350 = vlaneseq
          %v351 = vshrl.u32 %v350, 7
          %v352 = vsub.s32 2, %v351
          %v353 = vrot.slane %v345, %v352
          %v354 = vld [vmem:[#allocation9] sm:$0xff]
          %v355 = vld [vmem:[#allocation9 + $0x8] sm:$0xff]
          %v356 = vld [vmem:[#allocation9 + $0x10] sm:$0xff]
          %v357 = vld [vmem:[#allocation9 + $0x18] sm:$0xff]
          %s358 = scalar_lea.vmem [#allocation9], 32
          %v359 = vld [vmem:[%s358] sm:$0xff]
          %v360 = vld [vmem:[%s358 + $0x8] sm:$0xff]
          %v361 = vld [vmem:[%s358 + $0x10] sm:$0xff]
          %v362 = vld [vmem:[%s358 + $0x18] sm:$0xff]
          %s363 = scalar_lea.vmem [#allocation9], 64
          %v364 = vld [vmem:[%s363] sm:$0xff]
          %v365 = vld [vmem:[%s363 + $0x8] sm:$0xff]
          %v366 = vld [vmem:[%s363 + $0x10] sm:$0xff]
          %v367 = vld [vmem:[%s363 + $0x18] sm:$0xff]
          %v368 = vld [vmem:[#allocation11] sm:$0xff]
          %v369 = vld [vmem:[#allocation11 + $0x8] sm:$0xff]
          %v370 = vld [vmem:[#allocation11 + $0x10] sm:$0xff]
          %v371 = vld [vmem:[#allocation11 + $0x18] sm:$0xff]
          %s372 = scalar_lea.vmem [#allocation11], 32
          %v373 = vld [vmem:[%s372] sm:$0xff]
          %v374 = vld [vmem:[%s372 + $0x8] sm:$0xff]
          %v375 = vld [vmem:[%s372 + $0x10] sm:$0xff]
          %v376 = vld [vmem:[%s372 + $0x18] sm:$0xff]
          %s377 = scalar_lea.vmem [#allocation11], 64
          %v378 = vld [vmem:[%s377] sm:$0xff]
          %v379 = vld [vmem:[%s377 + $0x8] sm:$0xff]
          %v380 = vld [vmem:[%s377 + $0x10] sm:$0xff]
          %v381 = vld [vmem:[%s377 + $0x18] sm:$0xff]
          %v382 = vld [vmem:[%s271] sm:$0xff]
          %v383 = vld [vmem:[%s271 + $0x8] sm:$0xff]
          %v384 = vld [vmem:[%s271 + $0x10] sm:$0xff]
          %v385 = vld [vmem:[%s271 + $0x18] sm:$0xff]
          %vm386 = vcmask 261120
          %v388 = vsel %vm386, %v382, 0
          %v391 = vsel %vm386, %v383, 0
          %v394 = vsel %vm386, %v384, 0
          %v397 = vsel %vm386, %v385, 0
          %399 = vmatprep.subr.mxu0 0.0
          %400 = vmatpush1.msra.mxu0 %v354
          %401 = vmatprep.subr.mxu0 0.0
          %402 = vmatpush1.msra.mxu0 %v355
          %403 = vmatprep.subr.mxu0 0.0
          %404 = vmatpush1.msra.mxu0 %v356
          %405 = vmatprep.subr.mxu0 0.0
          %406 = vmatpush1.msra.mxu0 %v357
          %407 = vmatprep.subr.mxu0 0.0
          %408 = vmatpush1.msra.mxu0 0.0
          %409 = vmatprep.subr.mxu0 0.0
          %410 = vmatpush1.msra.mxu0 0.0
          %411 = vmatprep.subr.mxu0 0.0
          %412 = vmatpush1.msra.mxu0 0.0
          %413 = vmatprep.subr.mxu0 0.0
          %414 = vmatpush1.msra.mxu0 0.0
          %415 = vmatprep.subr.mxu0 0.0
          %416 = vmatpush1.msra.mxu0 0.0
          %417 = vmatprep.subr.mxu0 0.0
          %418 = vmatpush1.msra.mxu0 0.0
          %419 = vmatprep.subr.mxu0 0.0
          %420 = vmatpush1.msra.mxu0 0.0
          %421 = vmatprep.subr.mxu0 0.0
          %422 = vmatpush1.msra.mxu0 0.0
          %423 = vmatprep.subr.mxu0 0.0
          %424 = vmatpush1.msra.mxu0 0.0
          %425 = vmatprep.subr.mxu0 0.0
          %426 = vmatpush1.msra.mxu0 0.0
          %427 = vmatprep.subr.mxu0 0.0
          %428 = vmatpush1.msra.mxu0 0.0
          %429 = vmatprep.subr.mxu0 0.0
          %430 = vmatpush1.msra.mxu0 0.0
          %431 = vmatprep.subr.mxu0 0.0
          %432 = vmatpush1.msra.mxu0 0.0
          %433 = vmatprep.subr.mxu0 0.0
          %434 = vmatpush1.msra.mxu0 0.0
          %435 = vmatprep.subr.mxu0 0.0
          %436 = vmatpush1.msra.mxu0 0.0
          %437 = vmatprep.subr.mxu0 0.0
          %438 = vmatpush1.msra.mxu0 0.0
          %439 = vmatprep.subr.mxu0 0.0
          %440 = vmatpush1.msra.mxu0 0.0
          %441 = vmatprep.subr.mxu0 0.0
          %442 = vmatpush1.msra.mxu0 0.0
          %443 = vmatprep.subr.mxu0 0.0
          %444 = vmatpush1.msra.mxu0 0.0
          %445 = vmatprep.subr.mxu0 0.0
          %446 = vmatpush1.msra.mxu0 0.0
          %447 = vmatprep.subr.mxu0 0.0
          %448 = vmatpush1.msra.mxu0 0.0
          %449 = vmatprep.subr.mxu0 0.0
          %450 = vmatpush1.msra.mxu0 0.0
          %451 = vmatprep.subr.mxu0 0.0
          %452 = vmatpush1.msra.mxu0 0.0
          %453 = vmatprep.subr.mxu0 0.0
          %454 = vmatpush1.msra.mxu0 0.0
          %455 = vmatprep.subr.mxu0 0.0
          %456 = vmatpush1.msra.mxu0 0.0
          %457 = vmatprep.subr.mxu0 0.0
          %458 = vmatpush1.msra.mxu0 0.0
          %459 = vmatprep.subr.mxu0 0.0
          %460 = vmatpush1.msra.mxu0 0.0
          %461 = vmatprep.subr.mxu0 0.0
          %462 = vmatpush1.msra.mxu0 0.0
          %463 = vmatprep.mubr.f32.mxu0 0.0
          %464 = vmatmul.mubr.f32.gmra.mrb[0].mxu0 %v388
          %v465 = vpop.f32.mrb[0].mxu0
          %v466 = vadd.f32 0.0, %v465
          %v467 = vpop.f32.mrb[0].mxu0
          %468 = vmatprep.mubr.f32.mxu0 0.0
          %469 = vmatmul.mubr.f32.gmra.mrb[0].mxu0 %v391
          %v470 = vpop.f32.mrb[0].mxu0
          %v471 = vadd.f32 0.0, %v470
          %v472 = vpop.f32.mrb[0].mxu0
          %473 = vmatprep.mubr.f32.mxu0 0.0
          %474 = vmatmul.mubr.f32.gmra.mrb[0].mxu0 %v394
          %v475 = vpop.f32.mrb[0].mxu0
          %v476 = vadd.f32 0.0, %v475
          %v477 = vpop.f32.mrb[0].mxu0
          %478 = vmatprep.mubr.f32.mxu0 0.0
          %479 = vmatmul.mubr.f32.gmra.mrb[0].mxu0 %v397
          %v480 = vpop.f32.mrb[0].mxu0
          %v481 = vadd.f32 0.0, %v480
          %v482 = vpop.f32.mrb[0].mxu0
          %483 = vdwg.mxu0
          %v484 = vlaneseq
          %v485 = vshrl.u32 %v484, 7
          %v486 = vsub.s32 0, %v485
          %v487 = vrot.slane %v345, %v486
          %v488 = vadd.f32 %v466, %v487
          %v489 = vadd.f32 %v471, %v487
          %v490 = vadd.f32 %v476, %v487
          %v491 = vadd.f32 %v481, %v487
          %492 = vst.msk [vmem:[#allocation3] sm:$0xff] %vm386, %v488
          %493 = vst.msk [vmem:[#allocation3 + $0x8] sm:$0xff] %vm386, %v489
          %494 = vst.msk [vmem:[#allocation3 + $0x10] sm:$0xff] %vm386, %v490
          %495 = vst.msk [vmem:[#allocation3 + $0x18] sm:$0xff] %vm386, %v491
          %v496 = vld [vmem:[#allocation2] sm:$0xff]
          %s497 = scalar_lea.vmem [#allocation2], 8
          %v498 = vld [vmem:[%s497] sm:$0xff]
          %s499 = scalar_lea.vmem [#allocation2], 16
          %v500 = vld [vmem:[%s499] sm:$0xff]
          // While loop
          $region65: #{tpu_custom_call.1} parent=63 // loop_pre_header
            _
          $region66: #{tpu_custom_call.1} parent=63 // loop_header
            %s502 = sphi 0, %s504
            %p503 = scmp.ge.s32.totalorder %s502, %s322
            %v507 = vphi %v496, %v596
            %v508 = vphi %v498, %v745
            %v509 = vphi %v500, %v894
          $region67: #{tpu_custom_call.1} parent=63 // loop_header_branch
            %506 = sbr.rel (%p503) target = $region71
          $region68: #{tpu_custom_call.1} parent=63 // loop_body
            %s510 = sadd.s32 %s316, %s502
            %v511 = vstv %s510
            %vm512 = vcmp.lt.s32.totalorder %v511, %v344
            %v514 = vsel %vm386, %v507, 0
            %516 = vmatprep.subr.mxu0 0.0
            %517 = vmatpush1.msra.mxu0 %v368
            %518 = vmatprep.subr.mxu0 0.0
            %519 = vmatpush1.msra.mxu0 %v369
            %520 = vmatprep.subr.mxu0 0.0
            %521 = vmatpush1.msra.mxu0 %v370
            %522 = vmatprep.subr.mxu0 0.0
            %523 = vmatpush1.msra.mxu0 %v371
            %524 = vmatprep.subr.mxu0 0.0
            %525 = vmatpush1.msra.mxu0 0.0
            %526 = vmatprep.subr.mxu0 0.0
            %527 = vmatpush1.msra.mxu0 0.0
            %528 = vmatprep.subr.mxu0 0.0
            %529 = vmatpush1.msra.mxu0 0.0
            %530 = vmatprep.subr.mxu0 0.0
            %531 = vmatpush1.msra.mxu0 0.0
            %532 = vmatprep.subr.mxu0 0.0
            %533 = vmatpush1.msra.mxu0 0.0
            %534 = vmatprep.subr.mxu0 0.0
            %535 = vmatpush1.msra.mxu0 0.0
            %536 = vmatprep.subr.mxu0 0.0
            %537 = vmatpush1.msra.mxu0 0.0
            %538 = vmatprep.subr.mxu0 0.0
            %539 = vmatpush1.msra.mxu0 0.0
            %540 = vmatprep.subr.mxu0 0.0
            %541 = vmatpush1.msra.mxu0 0.0
            %542 = vmatprep.subr.mxu0 0.0
            %543 = vmatpush1.msra.mxu0 0.0
            %544 = vmatprep.subr.mxu0 0.0
            %545 = vmatpush1.msra.mxu0 0.0
            %546 = vmatprep.subr.mxu0 0.0
            %547 = vmatpush1.msra.mxu0 0.0
            %548 = vmatprep.subr.mxu0 0.0
            %549 = vmatpush1.msra.mxu0 0.0
            %550 = vmatprep.subr.mxu0 0.0
            %551 = vmatpush1.msra.mxu0 0.0
            %552 = vmatprep.subr.mxu0 0.0
            %553 = vmatpush1.msra.mxu0 0.0
            %554 = vmatprep.subr.mxu0 0.0
            %555 = vmatpush1.msra.mxu0 0.0
            %556 = vmatprep.subr.mxu0 0.0
            %557 = vmatpush1.msra.mxu0 0.0
            %558 = vmatprep.subr.mxu0 0.0
            %559 = vmatpush1.msra.mxu0 0.0
            %560 = vmatprep.subr.mxu0 0.0
            %561 = vmatpush1.msra.mxu0 0.0
            %562 = vmatprep.subr.mxu0 0.0
            %563 = vmatpush1.msra.mxu0 0.0
            %564 = vmatprep.subr.mxu0 0.0
            %565 = vmatpush1.msra.mxu0 0.0
            %566 = vmatprep.subr.mxu0 0.0
            %567 = vmatpush1.msra.mxu0 0.0
            %568 = vmatprep.subr.mxu0 0.0
            %569 = vmatpush1.msra.mxu0 0.0
            %570 = vmatprep.subr.mxu0 0.0
            %571 = vmatpush1.msra.mxu0 0.0
            %572 = vmatprep.subr.mxu0 0.0
            %573 = vmatpush1.msra.mxu0 0.0
            %574 = vmatprep.subr.mxu0 0.0
            %575 = vmatpush1.msra.mxu0 0.0
            %576 = vmatprep.subr.mxu0 0.0
            %577 = vmatpush1.msra.mxu0 0.0
            %578 = vmatprep.subr.mxu0 0.0
            %579 = vmatpush1.msra.mxu0 0.0
            %580 = vmatprep.mubr.f32.mxu0 0.0
            %581 = vmatmul.mubr.f32.gmra.mrb[0].mxu0 %v514
            %v582 = vpop.f32.mrb[0].mxu0
            %v583 = vadd.f32 0.0, %v582
            %v584 = vpop.f32.mrb[0].mxu0
            %585 = vdwg.mxu0
            %s586 = smul.u32 %s502, 8
            %s587 = scalar_lea.vmem [#allocation3], %s586
            %v588 = vld [vmem:[%s587] sm:$0xff]
            %v589 = vadd.f32 %v588, %v583
            %v590 = vtanh.pop %v589
            %v591 = vsel %vm512, 1, 0
            %592 = vset.pattern.permute.xlu0 0
            %593 = vperm.xlu0 %592, %v591
            %v594 = vpop.permute.xlu0 %593
            %vm595 = vcmp.eq.s32.totalorder %v594, 1
            %v596 = vsel %vm595, %v590, %v507
            %v598 = vsel %vm386, %v508, 0
            %600 = vmatprep.subr.mxu0 0.0
            %601 = vmatpush1.msra.mxu0 %v373
            %602 = vmatprep.subr.mxu0 0.0
            %603 = vmatpush1.msra.mxu0 %v374
            %604 = vmatprep.subr.mxu0 0.0
            %605 = vmatpush1.msra.mxu0 %v375
            %606 = vmatprep.subr.mxu0 0.0
            %607 = vmatpush1.msra.mxu0 %v376
            %608 = vmatprep.subr.mxu0 0.0
            %609 = vmatpush1.msra.mxu0 0.0
            %610 = vmatprep.subr.mxu0 0.0
            %611 = vmatpush1.msra.mxu0 0.0
            %612 = vmatprep.subr.mxu0 0.0
            %613 = vmatpush1.msra.mxu0 0.0
            %614 = vmatprep.subr.mxu0 0.0
            %615 = vmatpush1.msra.mxu0 0.0
            %616 = vmatprep.subr.mxu0 0.0
            %617 = vmatpush1.msra.mxu0 0.0
            %618 = vmatprep.subr.mxu0 0.0
            %619 = vmatpush1.msra.mxu0 0.0
            %620 = vmatprep.subr.mxu0 0.0
            %621 = vmatpush1.msra.mxu0 0.0
            %622 = vmatprep.subr.mxu0 0.0
            %623 = vmatpush1.msra.mxu0 0.0
            %624 = vmatprep.subr.mxu0 0.0
            %625 = vmatpush1.msra.mxu0 0.0
            %626 = vmatprep.subr.mxu0 0.0
            %627 = vmatpush1.msra.mxu0 0.0
            %628 = vmatprep.subr.mxu0 0.0
            %629 = vmatpush1.msra.mxu0 0.0
            %630 = vmatprep.subr.mxu0 0.0
            %631 = vmatpush1.msra.mxu0 0.0
            %632 = vmatprep.subr.mxu0 0.0
            %633 = vmatpush1.msra.mxu0 0.0
            %634 = vmatprep.subr.mxu0 0.0
            %635 = vmatpush1.msra.mxu0 0.0
            %636 = vmatprep.subr.mxu0 0.0
            %637 = vmatpush1.msra.mxu0 0.0
            %638 = vmatprep.subr.mxu0 0.0
            %639 = vmatpush1.msra.mxu0 0.0
            %640 = vmatprep.subr.mxu0 0.0
            %641 = vmatpush1.msra.mxu0 0.0
            %642 = vmatprep.subr.mxu0 0.0
            %643 = vmatpush1.msra.mxu0 0.0
            %644 = vmatprep.subr.mxu0 0.0
            %645 = vmatpush1.msra.mxu0 0.0
            %646 = vmatprep.subr.mxu0 0.0
            %647 = vmatpush1.msra.mxu0 0.0
            %648 = vmatprep.subr.mxu0 0.0
            %649 = vmatpush1.msra.mxu0 0.0
            %650 = vmatprep.subr.mxu0 0.0
            %651 = vmatpush1.msra.mxu0 0.0
            %652 = vmatprep.subr.mxu0 0.0
            %653 = vmatpush1.msra.mxu0 0.0
            %654 = vmatprep.subr.mxu0 0.0
            %655 = vmatpush1.msra.mxu0 0.0
            %656 = vmatprep.subr.mxu0 0.0
            %657 = vmatpush1.msra.mxu0 0.0
            %658 = vmatprep.subr.mxu0 0.0
            %659 = vmatpush1.msra.mxu0 0.0
            %660 = vmatprep.subr.mxu0 0.0
            %661 = vmatpush1.msra.mxu0 0.0
            %662 = vmatprep.subr.mxu0 0.0
            %663 = vmatpush1.msra.mxu0 0.0
            %664 = vmatprep.mubr.f32.mxu0 0.0
            %665 = vmatmul.mubr.f32.gmra.mrb[0].mxu0 %v598
            %v666 = vpop.f32.mrb[0].mxu0
            %v667 = vadd.f32 0.0, %v666
            %v668 = vpop.f32.mrb[0].mxu0
            %669 = vdwg.mxu0
            %v671 = vsel %vm386, %v596, 0
            %673 = vmatprep.subr.mxu0 0.0
            %674 = vmatpush1.msra.mxu0 %v359
            %675 = vmatprep.subr.mxu0 0.0
            %676 = vmatpush1.msra.mxu0 %v360
            %677 = vmatprep.subr.mxu0 0.0
            %678 = vmatpush1.msra.mxu0 %v361
            %679 = vmatprep.subr.mxu0 0.0
            %680 = vmatpush1.msra.mxu0 %v362
            %681 = vmatprep.subr.mxu0 0.0
            %682 = vmatpush1.msra.mxu0 0.0
            %683 = vmatprep.subr.mxu0 0.0
            %684 = vmatpush1.msra.mxu0 0.0
            %685 = vmatprep.subr.mxu0 0.0
            %686 = vmatpush1.msra.mxu0 0.0
            %687 = vmatprep.subr.mxu0 0.0
            %688 = vmatpush1.msra.mxu0 0.0
            %689 = vmatprep.subr.mxu0 0.0
            %690 = vmatpush1.msra.mxu0 0.0
            %691 = vmatprep.subr.mxu0 0.0
            %692 = vmatpush1.msra.mxu0 0.0
            %693 = vmatprep.subr.mxu0 0.0
            %694 = vmatpush1.msra.mxu0 0.0
            %695 = vmatprep.subr.mxu0 0.0
            %696 = vmatpush1.msra.mxu0 0.0
            %697 = vmatprep.subr.mxu0 0.0
            %698 = vmatpush1.msra.mxu0 0.0
            %699 = vmatprep.subr.mxu0 0.0
            %700 = vmatpush1.msra.mxu0 0.0
            %701 = vmatprep.subr.mxu0 0.0
            %702 = vmatpush1.msra.mxu0 0.0
            %703 = vmatprep.subr.mxu0 0.0
            %704 = vmatpush1.msra.mxu0 0.0
            %705 = vmatprep.subr.mxu0 0.0
            %706 = vmatpush1.msra.mxu0 0.0
            %707 = vmatprep.subr.mxu0 0.0
            %708 = vmatpush1.msra.mxu0 0.0
            %709 = vmatprep.subr.mxu0 0.0
            %710 = vmatpush1.msra.mxu0 0.0
            %711 = vmatprep.subr.mxu0 0.0
            %712 = vmatpush1.msra.mxu0 0.0
            %713 = vmatprep.subr.mxu0 0.0
            %714 = vmatpush1.msra.mxu0 0.0
            %715 = vmatprep.subr.mxu0 0.0
            %716 = vmatpush1.msra.mxu0 0.0
            %717 = vmatprep.subr.mxu0 0.0
            %718 = vmatpush1.msra.mxu0 0.0
            %719 = vmatprep.subr.mxu0 0.0
            %720 = vmatpush1.msra.mxu0 0.0
            %721 = vmatprep.subr.mxu0 0.0
            %722 = vmatpush1.msra.mxu0 0.0
            %723 = vmatprep.subr.mxu0 0.0
            %724 = vmatpush1.msra.mxu0 0.0
            %725 = vmatprep.subr.mxu0 0.0
            %726 = vmatpush1.msra.mxu0 0.0
            %727 = vmatprep.subr.mxu0 0.0
            %728 = vmatpush1.msra.mxu0 0.0
            %729 = vmatprep.subr.mxu0 0.0
            %730 = vmatpush1.msra.mxu0 0.0
            %731 = vmatprep.subr.mxu0 0.0
            %732 = vmatpush1.msra.mxu0 0.0
            %733 = vmatprep.subr.mxu0 0.0
            %734 = vmatpush1.msra.mxu0 0.0
            %735 = vmatprep.subr.mxu0 0.0
            %736 = vmatpush1.msra.mxu0 0.0
            %737 = vmatprep.mubr.f32.mxu0 0.0
            %738 = vmatmul.mubr.f32.gmra.mrb[0].mxu0 %v671
            %v739 = vpop.f32.mrb[0].mxu0
            %v740 = vadd.f32 %v667, %v739
            %v741 = vpop.f32.mrb[0].mxu0
            %742 = vdwg.mxu0
            %v743 = vadd.f32 %v740, %v349
            %v744 = vtanh.pop %v743
            %v745 = vsel %vm595, %v744, %v508
            %v747 = vsel %vm386, %v509, 0
            %749 = vmatprep.subr.mxu0 0.0
            %750 = vmatpush1.msra.mxu0 %v378
            %751 = vmatprep.subr.mxu0 0.0
            %752 = vmatpush1.msra.mxu0 %v379
            %753 = vmatprep.subr.mxu0 0.0
            %754 = vmatpush1.msra.mxu0 %v380
            %755 = vmatprep.subr.mxu0 0.0
            %756 = vmatpush1.msra.mxu0 %v381
            %757 = vmatprep.subr.mxu0 0.0
            %758 = vmatpush1.msra.mxu0 0.0
            %759 = vmatprep.subr.mxu0 0.0
            %760 = vmatpush1.msra.mxu0 0.0
            %761 = vmatprep.subr.mxu0 0.0
            %762 = vmatpush1.msra.mxu0 0.0
            %763 = vmatprep.subr.mxu0 0.0
            %764 = vmatpush1.msra.mxu0 0.0
            %765 = vmatprep.subr.mxu0 0.0
            %766 = vmatpush1.msra.mxu0 0.0
            %767 = vmatprep.subr.mxu0 0.0
            %768 = vmatpush1.msra.mxu0 0.0
            %769 = vmatprep.subr.mxu0 0.0
            %770 = vmatpush1.msra.mxu0 0.0
            %771 = vmatprep.subr.mxu0 0.0
            %772 = vmatpush1.msra.mxu0 0.0
            %773 = vmatprep.subr.mxu0 0.0
            %774 = vmatpush1.msra.mxu0 0.0
            %775 = vmatprep.subr.mxu0 0.0
            %776 = vmatpush1.msra.mxu0 0.0
            %777 = vmatprep.subr.mxu0 0.0
            %778 = vmatpush1.msra.mxu0 0.0
            %779 = vmatprep.subr.mxu0 0.0
            %780 = vmatpush1.msra.mxu0 0.0
            %781 = vmatprep.subr.mxu0 0.0
            %782 = vmatpush1.msra.mxu0 0.0
            %783 = vmatprep.subr.mxu0 0.0
            %784 = vmatpush1.msra.mxu0 0.0
            %785 = vmatprep.subr.mxu0 0.0
            %786 = vmatpush1.msra.mxu0 0.0
            %787 = vmatprep.subr.mxu0 0.0
            %788 = vmatpush1.msra.mxu0 0.0
            %789 = vmatprep.subr.mxu0 0.0
            %790 = vmatpush1.msra.mxu0 0.0
            %791 = vmatprep.subr.mxu0 0.0
            %792 = vmatpush1.msra.mxu0 0.0
            %793 = vmatprep.subr.mxu0 0.0
            %794 = vmatpush1.msra.mxu0 0.0
            %795 = vmatprep.subr.mxu0 0.0
            %796 = vmatpush1.msra.mxu0 0.0
            %797 = vmatprep.subr.mxu0 0.0
            %798 = vmatpush1.msra.mxu0 0.0
            %799 = vmatprep.subr.mxu0 0.0
            %800 = vmatpush1.msra.mxu0 0.0
            %801 = vmatprep.subr.mxu0 0.0
            %802 = vmatpush1.msra.mxu0 0.0
            %803 = vmatprep.subr.mxu0 0.0
            %804 = vmatpush1.msra.mxu0 0.0
            %805 = vmatprep.subr.mxu0 0.0
            %806 = vmatpush1.msra.mxu0 0.0
            %807 = vmatprep.subr.mxu0 0.0
            %808 = vmatpush1.msra.mxu0 0.0
            %809 = vmatprep.subr.mxu0 0.0
            %810 = vmatpush1.msra.mxu0 0.0
            %811 = vmatprep.subr.mxu0 0.0
            %812 = vmatpush1.msra.mxu0 0.0
            %813 = vmatprep.mubr.f32.mxu0 0.0
            %814 = vmatmul.mubr.f32.gmra.mrb[0].mxu0 %v747
            %v815 = vpop.f32.mrb[0].mxu0
            %v816 = vadd.f32 0.0, %v815
            %v817 = vpop.f32.mrb[0].mxu0
            %818 = vdwg.mxu0
            %v820 = vsel %vm386, %v745, 0
            %822 = vmatprep.subr.mxu0 0.0
            %823 = vmatpush1.msra.mxu0 %v364
            %824 = vmatprep.subr.mxu0 0.0
            %825 = vmatpush1.msra.mxu0 %v365
            %826 = vmatprep.subr.mxu0 0.0
            %827 = vmatpush1.msra.mxu0 %v366
            %828 = vmatprep.subr.mxu0 0.0
            %829 = vmatpush1.msra.mxu0 %v367
            %830 = vmatprep.subr.mxu0 0.0
            %831 = vmatpush1.msra.mxu0 0.0
            %832 = vmatprep.subr.mxu0 0.0
            %833 = vmatpush1.msra.mxu0 0.0
            %834 = vmatprep.subr.mxu0 0.0
            %835 = vmatpush1.msra.mxu0 0.0
            %836 = vmatprep.subr.mxu0 0.0
            %837 = vmatpush1.msra.mxu0 0.0
            %838 = vmatprep.subr.mxu0 0.0
            %839 = vmatpush1.msra.mxu0 0.0
            %840 = vmatprep.subr.mxu0 0.0
            %841 = vmatpush1.msra.mxu0 0.0
            %842 = vmatprep.subr.mxu0 0.0
            %843 = vmatpush1.msra.mxu0 0.0
            %844 = vmatprep.subr.mxu0 0.0
            %845 = vmatpush1.msra.mxu0 0.0
            %846 = vmatprep.subr.mxu0 0.0
            %847 = vmatpush1.msra.mxu0 0.0
            %848 = vmatprep.subr.mxu0 0.0
            %849 = vmatpush1.msra.mxu0 0.0
            %850 = vmatprep.subr.mxu0 0.0
            %851 = vmatpush1.msra.mxu0 0.0
            %852 = vmatprep.subr.mxu0 0.0
            %853 = vmatpush1.msra.mxu0 0.0
            %854 = vmatprep.subr.mxu0 0.0
            %855 = vmatpush1.msra.mxu0 0.0
            %856 = vmatprep.subr.mxu0 0.0
            %857 = vmatpush1.msra.mxu0 0.0
            %858 = vmatprep.subr.mxu0 0.0
            %859 = vmatpush1.msra.mxu0 0.0
            %860 = vmatprep.subr.mxu0 0.0
            %861 = vmatpush1.msra.mxu0 0.0
            %862 = vmatprep.subr.mxu0 0.0
            %863 = vmatpush1.msra.mxu0 0.0
            %864 = vmatprep.subr.mxu0 0.0
            %865 = vmatpush1.msra.mxu0 0.0
            %866 = vmatprep.subr.mxu0 0.0
            %867 = vmatpush1.msra.mxu0 0.0
            %868 = vmatprep.subr.mxu0 0.0
            %869 = vmatpush1.msra.mxu0 0.0
            %870 = vmatprep.subr.mxu0 0.0
            %871 = vmatpush1.msra.mxu0 0.0
            %872 = vmatprep.subr.mxu0 0.0
            %873 = vmatpush1.msra.mxu0 0.0
            %874 = vmatprep.subr.mxu0 0.0
            %875 = vmatpush1.msra.mxu0 0.0
            %876 = vmatprep.subr.mxu0 0.0
            %877 = vmatpush1.msra.mxu0 0.0
            %878 = vmatprep.subr.mxu0 0.0
            %879 = vmatpush1.msra.mxu0 0.0
            %880 = vmatprep.subr.mxu0 0.0
            %881 = vmatpush1.msra.mxu0 0.0
            %882 = vmatprep.subr.mxu0 0.0
            %883 = vmatpush1.msra.mxu0 0.0
            %884 = vmatprep.subr.mxu0 0.0
            %885 = vmatpush1.msra.mxu0 0.0
            %886 = vmatprep.mubr.f32.mxu0 0.0
            %887 = vmatmul.mubr.f32.gmra.mrb[0].mxu0 %v820
            %v888 = vpop.f32.mrb[0].mxu0
            %v889 = vadd.f32 %v816, %v888
            %v890 = vpop.f32.mrb[0].mxu0
            %891 = vdwg.mxu0
            %v892 = vadd.f32 %v889, %v353
            %v893 = vtanh.pop %v892
            %v894 = vsel %vm595, %v893, %v509
            %v895 = vsel %vm595, %v590, 0.0
            %s896 = scalar_lea.vmem %s309, %s586 [#allocation12]
            %897 = vst.msk [vmem:[%s896] sm:$0xff] %vm386, %v895
            %v898 = vsel %vm595, %v744, 0.0
            %900 = vrot.lane.b32.xlu0 %v898, 32
            %v901 = vpop.permute.xlu0 %900
            %vm903 = vcmask 523520
            %904 = vst.msk [vmem:[%s896] sm:$0xff] %vm903, %v901
            %v905 = vsel %vm595, %v893, 0.0
            %907 = vrot.lane.b32.xlu0 %v905, 64
            %v908 = vpop.permute.xlu0 %907
            %vm910 = vcmask 785920
            %911 = vst.msk [vmem:[%s896] sm:$0xff] %vm910, %v908
          $region69: #{tpu_custom_call.1} parent=63 // loop_footer
            %s504 = sadd.s32 %s502, 1
          $region70: #{tpu_custom_call.1} parent=63 // loop_footer_branch
            %501 = sbr.rel target = $region66
          $region71: #{tpu_custom_call.1} parent=63 // loop_exit
            _
          %912 = vst.msk [vmem:[#allocation2] sm:$0xff] %vm386, %v507
          %913 = vst.msk [vmem:[%s497] sm:$0xff] %vm386, %v508
          %914 = vst.msk [vmem:[%s499] sm:$0xff] %vm386, %v509
        $region64: #{tpu_custom_call.1} parent=39 // pred_fallthru
          _
        %s915 = sand.u32 %s169, 1
        %s916 = scalar_lea.sflag [#allocation8], %s915
        %s917 = sand.u32 %s169, 1
        %s918 = smul.addr %s917, 32
        %s919 = scalar_lea.vmem [#allocation12], %s918
        // Predicated region
        $region72: #{tpu_custom_call.1} parent=39 // pred_check
          %p920 = pneg %p179
        $region73: #{tpu_custom_call.1} parent=39 // pred_check_branch
          %922 = sbr.rel (%p920) target = $region75
        $region74: #{tpu_custom_call.1} parent=39 // pred_region
          %s923 = smul.u32 4, %s35
          %s925 = ssub.s32 512, 512
          %926 = vsyncadd %s916, %s925
          %s927 = smul.addr %s923, 2
          %s928 = sadd.s32 %s34, %s927
          %s929 = smul.addr %s928, 128
          %s930 = scalar_lea.hbm %s6, %s929
          %s931 = sshll.u32 %s919, 4
          %s932 = int_to_ptr.vmem [resolvable:$true] %s931
          %937 = dma.vmem_to_hbm [thread:$0]  %s932, 512, %s930, %s916, 128, 256, 8
        $region75: #{tpu_custom_call.1} parent=39 // pred_fallthru
          _
      $region40: #{tpu_custom_call.1} parent=5 // pred_fallthru
        _
      %p938 = scmp.le.s32.totalorder 2, %s25
      // Predicated region
      $region76: #{tpu_custom_call.1} parent=5 // pred_check
        %p939 = pneg %p938
      $region77: #{tpu_custom_call.1} parent=5 // pred_check_branch
        %941 = sbr.rel (%p939) target = $region79
      $region78: #{tpu_custom_call.1} parent=5 // pred_region
        %s942 = ssub.s32 %s25, 2
        // Predicated region
        $region80: #{tpu_custom_call.1} parent=78 // pred_check
          %p943 = pneg %p185
        $region81: #{tpu_custom_call.1} parent=78 // pred_check_branch
          %945 = sbr.rel (%p943) target = $region83
        $region82: #{tpu_custom_call.1} parent=78 // pred_region
          %s946 = sand.u32 %s170, 1
          %s947 = scalar_lea.sflag [#allocation8], %s946
          %s948 = sand.u32 %s170, 1
          %s949 = smul.addr %s948, 32
          %s950 = scalar_lea.vmem [#allocation12], %s949
          %951 = dma.done %s947, 512
        $region83: #{tpu_custom_call.1} parent=78 // pred_fallthru
          _
      $region79: #{tpu_custom_call.1} parent=5 // pred_fallthru
        _
    $region6: #{tpu_custom_call.1} parent=1 // loop_footer
      %s29 = sadd.s32 1, %s25
    $region7: #{tpu_custom_call.1} parent=1 // loop_footer_branch
      %24 = sbr.rel target = $region3
    $region8: #{tpu_custom_call.1} parent=1 // loop_exit
      _
    %952 = vsyncpa [#allocation7], 1
    %s953 = scalar_lea.sflag [#allocation7], 1
    %954 = vsyncpa %s953, 1
    %955 = vsyncpa [#allocation10], 1
    %956 = vsyncpa [#allocation8], 1
    %s957 = scalar_lea.sflag [#allocation8], 1
    %958 = vsyncpa %s957, 1

</llo_original>
